<compile_context>
chip_gen: v7x
topology: tpu7x:2x2x1
jax: 0.10.0
libtpu: 0.0.40
codegen_flags: <defaults>
</compile_context>

<pallas_src>
import jax
import jax.numpy as jnp
from jax.experimental import pallas as pl
from jax.experimental.pallas import tpu as pltpu

BN_EPS = 1e-5
LANE = 128  # TODO(synk): evaluate 256 padding on v6e/v7x for odd multiples of 128.


def _round_up(n, m):
    return (n + m - 1) // m * m


def _vmem_limit_bytes():
    """Generation-aware VMEM budget (v5e/v6e: 128 MiB physical, v7x: 64 MiB)."""
    cap = 128 * 1024 * 1024
    try:
        info_cap = pltpu.get_tpu_info().vmem_capacity_bytes
        if info_cap:
            cap = int(info_cap)
    except Exception:
        pass
    # Leave headroom for compiler scratch; never ask for more than ~100 MiB.
    return int(min(cap - 16 * 1024 * 1024, 100 * 1024 * 1024))


def basic_block_kernel(
    x_ref,
    w1_ref, g1_ref, be1_ref,
    w2_hbm, g2_ref, be2_ref,
    w3_hbm, g3_ref, be3_ref,
    w4_hbm, g4_ref, be4_ref,
    o_ref,
    w2_buf, w3_buf, w4_buf, dma_sem,
):
    # Kick off prefetch of layers 2-4 weights (HBM -> VMEM) so the transfers
    # overlap layers 1-3 compute; the gridless auto-DMA only covers layer 1.
    cp2 = pltpu.make_async_copy(w2_hbm, w2_buf, dma_sem.at[0]); cp2.start()
    cp3 = pltpu.make_async_copy(w3_hbm, w3_buf, dma_sem.at[1]); cp3.start()
    cp4 = pltpu.make_async_copy(w4_hbm, w4_buf, dma_sem.at[2]); cp4.start()

    def linear_bn(h_bf16, w, g, be, relu):
        # bf16 MXU matmul, f32 accumulation. Linear bias omitted: exactly
        # cancelled by the training-mode BN mean subtraction.
        y = jnp.dot(h_bf16, w, preferred_element_type=jnp.float32)
        mean = jnp.mean(y, axis=0, keepdims=True)
        # Single-pass variance, clamped at 0 (cancellation can push it slightly
        # negative, which would NaN the rsqrt).
        var = jnp.maximum(jnp.mean(y * y, axis=0, keepdims=True) - mean * mean, 0.0)
        # BN folded to one per-feature scale/shift ((1, N) math only).
        scale = g * jax.lax.rsqrt(var + BN_EPS)
        shift = be - mean * scale
        out = y * scale + shift
        if relu:
            # Emit inter-layer activation directly in bf16: halves its footprint
            # and is already the dtype the next matmul needs.
            return jnp.maximum(out, 0.0).astype(jnp.bfloat16)
        return out  # layer 4 stays f32 for the residual add

    h = linear_bn(x_ref[...].astype(jnp.bfloat16),
                  w1_ref[...], g1_ref[...], be1_ref[...], relu=True)   # layer1
    cp2.wait()
    h = linear_bn(h, w2_buf[...], g2_ref[...], be2_ref[...], relu=True)   # layer2
    cp3.wait()
    h = linear_bn(h, w3_buf[...], g3_ref[...], be3_ref[...], relu=True)   # layer3
    cp4.wait()
    h = linear_bn(h, w4_buf[...], g4_ref[...], be4_ref[...], relu=False)  # layer4
    # Re-read x from VMEM here (not held live across the four layers).
    o_ref[...] = jnp.maximum(h + x_ref[...], 0.0)                          # residual + ReLU


def prepare_params(params, input_size, hidden_size, lane=LANE):
    """Pad feature dims to multiples of `lane`, cast weights to bf16, drop biases.

    The padded gamma/beta columns MUST stay zero: scale = 0*rsqrt(eps) = 0 and
    shift = 0, so padded feature columns remain exactly zero through every layer
    and the final [:, :input_size] slice is exact. The kernel relies on this.
    """
    dp = _round_up(input_size, lane)
    hp = _round_up(hidden_size, lane)
    dims = [
        (input_size, hidden_size, dp, hp),
        (hidden_size, hidden_size, hp, hp),
        (hidden_size, hidden_size, hp, hp),
        (hidden_size, input_size, hp, dp),
    ]
    prepared = []
    for i, (fi, fo, fip, fop) in enumerate(dims):
        w, _b, g, be = params[4 * i: 4 * i + 4]  # Linear bias dropped (cancelled by BN)
        assert fi <= fip and fo <= fop
        wp = jnp.zeros((fip, fop), jnp.bfloat16).at[:fi, :fo].set(w.astype(jnp.bfloat16))
        gp = jnp.zeros((1, fop), jnp.float32).at[:, :fo].set(g)   # pad gamma with 0
        bep = jnp.zeros((1, fop), jnp.float32).at[:, :fo].set(be)  # pad beta with 0
        prepared += [wp, gp, bep]
    return prepared, dp, hp


def basic_block(x, prepared_params, dp, hp):
    """x: (B, input_size) float32. prepared_params: 12 padded arrays."""
    B, D = x.shape
    x_pad = jnp.zeros((B, dp), jnp.float32).at[:, :D].set(x)

    vmem = pl.BlockSpec(memory_space=pltpu.MemorySpace.VMEM)
    hbm = pl.BlockSpec(memory_space=pl.ANY)  # raw HBM ref; DMA'd manually in-kernel
    in_specs = [
        vmem,                 # x
        vmem, vmem, vmem,     # w1, g1, be1  (auto-DMA'd before the body)
        hbm,  vmem, vmem,     # w2 prefetched in-kernel
        hbm,  vmem, vmem,     # w3 prefetched in-kernel
        hbm,  vmem, vmem,     # w4 prefetched in-kernel
    ]

    weight_elems = dp * hp + 2 * hp * hp + hp * dp
    cost = pl.CostEstimate(
        flops=2 * B * weight_elems,
        transcendentals=3 * hp + dp,                       # per-feature rsqrt
        bytes_accessed=2 * weight_elems                    # bf16 weights
        + 2 * B * dp * 4                                   # x in + out (f32)
        + 2 * (3 * hp + dp) * 4,                           # gamma/beta (f32)
    )

    out = pl.pallas_call(
        basic_block_kernel,
        out_shape=jax.ShapeDtypeStruct((B, dp), jnp.float32),
        in_specs=in_specs,
        out_specs=vmem,
        scratch_shapes=[
            pltpu.VMEM((hp, hp), jnp.bfloat16),   # w2 prefetch buffer
            pltpu.VMEM((hp, hp), jnp.bfloat16),   # w3 prefetch buffer
            pltpu.VMEM((hp, dp), jnp.bfloat16),   # w4 prefetch buffer
            pltpu.SemaphoreType.DMA((3,)),
        ],
        input_output_aliases={0: 0},              # reuse x_pad's HBM buffer for the output
        compiler_params=pltpu.CompilerParams(vmem_limit_bytes=_vmem_limit_bytes()),
        cost_estimate=cost,
    )(x_pad, *prepared_params)
    return out[:, :D]


def init_params(key, input_size, hidden_size):
    """PyTorch-style init. Linear weights stored as (in, out) = W.T; biases kept
    for the faithful reference even though the kernel does not need them."""
    dims = [
        (input_size, hidden_size),
        (hidden_size, hidden_size),
        (hidden_size, hidden_size),
        (hidden_size, input_size),
    ]
    params = []
    for (fan_in, fan_out) in dims:
        key, kw, kb = jax.random.split(key, 3)
        bound = 1.0 / jnp.sqrt(fan_in)
        w = jax.random.uniform(kw, (fan_in, fan_out), jnp.float32, -bound, bound)
        b = jax.random.uniform(kb, (1, fan_out), jnp.float32, -bound, bound)
        gamma = jnp.ones((1, fan_out), jnp.float32)   # BatchNorm1d default weight
        beta = jnp.zeros((1, fan_out), jnp.float32)   # BatchNorm1d default bias
        params += [w, b, gamma, beta]
    return params


def reference_f32(x, params):
    """PyTorch-faithful reference: f32 matmul + bias, two-pass batch var."""
    out = x
    for layer in range(4):
        w, b, g, be = params[4 * layer: 4 * layer + 4]
        y = out @ w + b
        mean = jnp.mean(y, axis=0, keepdims=True)
        var = jnp.mean((y - mean) ** 2, axis=0, keepdims=True)
        y = (y - mean) / jnp.sqrt(var + BN_EPS) * g + be
        out = jnp.maximum(y, 0.0) if layer < 3 else y
    return jnp.maximum(out + x, 0.0)


def reference_kernel_numerics(x, params):
    """Mirror of the kernel algebra (bf16 dot, no bias, single-pass clamped
    variance, folded BN, bf16 inter-layer activations)."""
    out = x.astype(jnp.bfloat16)
    for layer in range(4):
        w, _b, g, be = params[4 * layer: 4 * layer + 4]
        y = jnp.dot(out, w.astype(jnp.bfloat16), preferred_element_type=jnp.float32)
        mean = jnp.mean(y, axis=0, keepdims=True)
        var = jnp.maximum(jnp.mean(y * y, axis=0, keepdims=True) - mean * mean, 0.0)
        scale = g * jax.lax.rsqrt(var + BN_EPS)
        shift = be - mean * scale
        y = y * scale + shift
        out = jnp.maximum(y, 0.0).astype(jnp.bfloat16) if layer < 3 else y
    return jnp.maximum(out + x, 0.0)


if __name__ == "__main__":
    input_size, hidden_size, batch = 16, 32, 8
    key = jax.random.PRNGKey(0)
    kx, kp = jax.random.split(key)
    x = jax.random.normal(kx, (batch, input_size), jnp.float32)
    params = init_params(kp, input_size, hidden_size)
    prepared, dp, hp = prepare_params(params, input_size, hidden_size)

    out = basic_block(x, prepared, dp, hp)
    jax.block_until_ready(out)
    assert out.shape == (batch, input_size)

    # Tight check against a reference that uses the exact same numerics.
    ref_exact = reference_kernel_numerics(x, params)
    err_exact = float(jnp.max(jnp.abs(out - ref_exact)))
    assert jnp.allclose(out, ref_exact, atol=1e-4, rtol=1e-4), (
        f"max abs err vs kernel-numerics ref {err_exact}"
    )

    # Loose sanity check against the PyTorch-faithful f32 reference
    # (difference is only bf16-matmul rounding; bias drop is exact under BN).
    ref_f32 = reference_f32(x, params)
    err_f32 = float(jnp.max(jnp.abs(out - ref_f32)))
    assert jnp.allclose(out, ref_f32, atol=0.15, rtol=0.15), (
        f"max abs err vs f32 ref {err_f32}"
    )

    print("KERNEL_OK")
</pallas_src>

<mosaic_0001>
module attributes {stable_mosaic.version = 11 : i64} {
  func.func @basic_block_kernel(%arg0: memref<8x128xf32, #tpu.memory_space<vmem>>, %arg1: memref<128x128xbf16, #tpu.memory_space<vmem>>, %arg2: memref<1x128xf32, #tpu.memory_space<vmem>>, %arg3: memref<1x128xf32, #tpu.memory_space<vmem>>, %arg4: memref<128x128xbf16, #tpu.memory_space<any>>, %arg5: memref<1x128xf32, #tpu.memory_space<vmem>>, %arg6: memref<1x128xf32, #tpu.memory_space<vmem>>, %arg7: memref<128x128xbf16, #tpu.memory_space<any>>, %arg8: memref<1x128xf32, #tpu.memory_space<vmem>>, %arg9: memref<1x128xf32, #tpu.memory_space<vmem>>, %arg10: memref<128x128xbf16, #tpu.memory_space<any>>, %arg11: memref<1x128xf32, #tpu.memory_space<vmem>>, %arg12: memref<1x128xf32, #tpu.memory_space<vmem>>, %arg13: memref<8x128xf32, #tpu.memory_space<vmem>>, %arg14: memref<128x128xbf16, #tpu.memory_space<vmem>>, %arg15: memref<128x128xbf16, #tpu.memory_space<vmem>>, %arg16: memref<128x128xbf16, #tpu.memory_space<vmem>>, %arg17: memref<3x!tpu.dma_semaphore, #tpu.memory_space<semaphore_mem>>) attributes {dimension_semantics = [], scalar_prefetch = 0 : i64, scratch_operands = 4 : i64, tpu.core_type = #tpu.core_type<tc>} {
    %c0_i32 = arith.constant 0 : i32
    %0 = tpu.memref_slice %arg17[%c0_i32] : memref<3x!tpu.dma_semaphore, #tpu.memory_space<semaphore_mem>> -> memref<1x!tpu.dma_semaphore, #tpu.memory_space<semaphore_mem>>
    %1 = tpu.memref_squeeze %0 : memref<1x!tpu.dma_semaphore, #tpu.memory_space<semaphore_mem>> -> memref<!tpu.dma_semaphore, #tpu.memory_space<semaphore_mem>>
    tpu.enqueue_dma source(%arg4 : memref<128x128xbf16, #tpu.memory_space<any>>) target(%arg14 : memref<128x128xbf16, #tpu.memory_space<vmem>>) target_semaphore(%1 : memref<!tpu.dma_semaphore, #tpu.memory_space<semaphore_mem>>)
    %c1_i32 = arith.constant 1 : i32
    %2 = tpu.memref_slice %arg17[%c1_i32] : memref<3x!tpu.dma_semaphore, #tpu.memory_space<semaphore_mem>> -> memref<1x!tpu.dma_semaphore, #tpu.memory_space<semaphore_mem>>
    %3 = tpu.memref_squeeze %2 : memref<1x!tpu.dma_semaphore, #tpu.memory_space<semaphore_mem>> -> memref<!tpu.dma_semaphore, #tpu.memory_space<semaphore_mem>>
    tpu.enqueue_dma source(%arg7 : memref<128x128xbf16, #tpu.memory_space<any>>) target(%arg15 : memref<128x128xbf16, #tpu.memory_space<vmem>>) target_semaphore(%3 : memref<!tpu.dma_semaphore, #tpu.memory_space<semaphore_mem>>)
    %c2_i32 = arith.constant 2 : i32
    %4 = tpu.memref_slice %arg17[%c2_i32] : memref<3x!tpu.dma_semaphore, #tpu.memory_space<semaphore_mem>> -> memref<1x!tpu.dma_semaphore, #tpu.memory_space<semaphore_mem>>
    %5 = tpu.memref_squeeze %4 : memref<1x!tpu.dma_semaphore, #tpu.memory_space<semaphore_mem>> -> memref<!tpu.dma_semaphore, #tpu.memory_space<semaphore_mem>>
    tpu.enqueue_dma source(%arg10 : memref<128x128xbf16, #tpu.memory_space<any>>) target(%arg16 : memref<128x128xbf16, #tpu.memory_space<vmem>>) target_semaphore(%5 : memref<!tpu.dma_semaphore, #tpu.memory_space<semaphore_mem>>)
    %c0 = arith.constant 0 : index
    %c0_0 = arith.constant 0 : index
    %6 = vector.load %arg0[%c0, %c0_0] : memref<8x128xf32, #tpu.memory_space<vmem>>, vector<8x128xf32>
    %7 = arith.truncf %6 : vector<8x128xf32> to vector<8x128xbf16>
    %c0_1 = arith.constant 0 : index
    %c0_2 = arith.constant 0 : index
    %8 = vector.load %arg1[%c0_1, %c0_2] : memref<128x128xbf16, #tpu.memory_space<vmem>>, vector<128x128xbf16>
    %c0_3 = arith.constant 0 : index
    %c0_4 = arith.constant 0 : index
    %9 = vector.load %arg2[%c0_3, %c0_4] : memref<1x128xf32, #tpu.memory_space<vmem>>, vector<1x128xf32>
    %c0_5 = arith.constant 0 : index
    %c0_6 = arith.constant 0 : index
    %10 = vector.load %arg3[%c0_5, %c0_6] : memref<1x128xf32, #tpu.memory_space<vmem>>, vector<1x128xf32>
    %cst = arith.constant dense<0.000000e+00> : vector<8x128xf32>
    %11 = tpu.matmul %7, %8, %cst {dimension_numbers = #tpu.dot_dimension_numbers<[1], [0], [0], [1], [0, 0, 1, 1], [], []>} : vector<8x128xbf16>, vector<128x128xbf16>, vector<8x128xf32> -> vector<8x128xf32>
    %cst_7 = arith.constant dense<0.000000e+00> : vector<128xf32>
    %12 = vector.multi_reduction <add>, %11, %cst_7 [0] : vector<8x128xf32> to vector<128xf32>
    %13 = vector.shape_cast %12 : vector<128xf32> to vector<1x128xf32>
    %cst_8 = arith.constant 8.000000e+00 : f32
    %14 = vector.broadcast %cst_8 : f32 to vector<1x128xf32>
    %15 = arith.divf %13, %14 : vector<1x128xf32>
    %16 = arith.mulf %11, %11 : vector<8x128xf32>
    %cst_9 = arith.constant dense<0.000000e+00> : vector<128xf32>
    %17 = vector.multi_reduction <add>, %16, %cst_9 [0] : vector<8x128xf32> to vector<128xf32>
    %18 = vector.shape_cast %17 : vector<128xf32> to vector<1x128xf32>
    %cst_10 = arith.constant 8.000000e+00 : f32
    %19 = vector.broadcast %cst_10 : f32 to vector<1x128xf32>
    %20 = arith.divf %18, %19 : vector<1x128xf32>
    %21 = arith.mulf %15, %15 : vector<1x128xf32>
    %22 = arith.subf %20, %21 : vector<1x128xf32>
    %cst_11 = arith.constant 0.000000e+00 : f32
    %23 = vector.broadcast %cst_11 : f32 to vector<1x128xf32>
    %24 = arith.maximumf %22, %23 : vector<1x128xf32>
    %cst_12 = arith.constant 9.99999974E-6 : f32
    %25 = vector.broadcast %cst_12 : f32 to vector<1x128xf32>
    %26 = arith.addf %24, %25 : vector<1x128xf32>
    %27 = math.rsqrt %26 : vector<1x128xf32>
    %28 = arith.mulf %9, %27 : vector<1x128xf32>
    %29 = arith.mulf %15, %28 : vector<1x128xf32>
    %30 = arith.subf %10, %29 : vector<1x128xf32>
    %31 = vector.broadcast %28 : vector<1x128xf32> to vector<8x128xf32>
    %32 = arith.mulf %11, %31 : vector<8x128xf32>
    %33 = vector.broadcast %30 : vector<1x128xf32> to vector<8x128xf32>
    %34 = arith.addf %32, %33 : vector<8x128xf32>
    %cst_13 = arith.constant 0.000000e+00 : f32
    %35 = vector.broadcast %cst_13 : f32 to vector<8x128xf32>
    %36 = arith.maximumf %34, %35 : vector<8x128xf32>
    %37 = arith.truncf %36 : vector<8x128xf32> to vector<8x128xbf16>
    %c0_i32_14 = arith.constant 0 : i32
    %38 = tpu.memref_slice %arg17[%c0_i32_14] : memref<3x!tpu.dma_semaphore, #tpu.memory_space<semaphore_mem>> -> memref<1x!tpu.dma_semaphore, #tpu.memory_space<semaphore_mem>>
    %39 = tpu.memref_squeeze %38 : memref<1x!tpu.dma_semaphore, #tpu.memory_space<semaphore_mem>> -> memref<!tpu.dma_semaphore, #tpu.memory_space<semaphore_mem>>
    tpu.wait_dma2 semaphore(%39 : memref<!tpu.dma_semaphore, #tpu.memory_space<semaphore_mem>>) src(%arg4 : memref<128x128xbf16, #tpu.memory_space<any>>) dst(%arg14 : memref<128x128xbf16, #tpu.memory_space<vmem>>)
    %c0_15 = arith.constant 0 : index
    %c0_16 = arith.constant 0 : index
    %40 = vector.load %arg14[%c0_15, %c0_16] : memref<128x128xbf16, #tpu.memory_space<vmem>>, vector<128x128xbf16>
    %c0_17 = arith.constant 0 : index
    %c0_18 = arith.constant 0 : index
    %41 = vector.load %arg5[%c0_17, %c0_18] : memref<1x128xf32, #tpu.memory_space<vmem>>, vector<1x128xf32>
    %c0_19 = arith.constant 0 : index
    %c0_20 = arith.constant 0 : index
    %42 = vector.load %arg6[%c0_19, %c0_20] : memref<1x128xf32, #tpu.memory_space<vmem>>, vector<1x128xf32>
    %cst_21 = arith.constant dense<0.000000e+00> : vector<8x128xf32>
    %43 = tpu.matmul %37, %40, %cst_21 {dimension_numbers = #tpu.dot_dimension_numbers<[1], [0], [0], [1], [0, 0, 1, 1], [], []>} : vector<8x128xbf16>, vector<128x128xbf16>, vector<8x128xf32> -> vector<8x128xf32>
    %cst_22 = arith.constant dense<0.000000e+00> : vector<128xf32>
    %44 = vector.multi_reduction <add>, %43, %cst_22 [0] : vector<8x128xf32> to vector<128xf32>
    %45 = vector.shape_cast %44 : vector<128xf32> to vector<1x128xf32>
    %cst_23 = arith.constant 8.000000e+00 : f32
    %46 = vector.broadcast %cst_23 : f32 to vector<1x128xf32>
    %47 = arith.divf %45, %46 : vector<1x128xf32>
    %48 = arith.mulf %43, %43 : vector<8x128xf32>
    %cst_24 = arith.constant dense<0.000000e+00> : vector<128xf32>
    %49 = vector.multi_reduction <add>, %48, %cst_24 [0] : vector<8x128xf32> to vector<128xf32>
    %50 = vector.shape_cast %49 : vector<128xf32> to vector<1x128xf32>
    %cst_25 = arith.constant 8.000000e+00 : f32
    %51 = vector.broadcast %cst_25 : f32 to vector<1x128xf32>
    %52 = arith.divf %50, %51 : vector<1x128xf32>
    %53 = arith.mulf %47, %47 : vector<1x128xf32>
    %54 = arith.subf %52, %53 : vector<1x128xf32>
    %cst_26 = arith.constant 0.000000e+00 : f32
    %55 = vector.broadcast %cst_26 : f32 to vector<1x128xf32>
    %56 = arith.maximumf %54, %55 : vector<1x128xf32>
    %cst_27 = arith.constant 9.99999974E-6 : f32
    %57 = vector.broadcast %cst_27 : f32 to vector<1x128xf32>
    %58 = arith.addf %56, %57 : vector<1x128xf32>
    %59 = math.rsqrt %58 : vector<1x128xf32>
    %60 = arith.mulf %41, %59 : vector<1x128xf32>
    %61 = arith.mulf %47, %60 : vector<1x128xf32>
    %62 = arith.subf %42, %61 : vector<1x128xf32>
    %63 = vector.broadcast %60 : vector<1x128xf32> to vector<8x128xf32>
    %64 = arith.mulf %43, %63 : vector<8x128xf32>
    %65 = vector.broadcast %62 : vector<1x128xf32> to vector<8x128xf32>
    %66 = arith.addf %64, %65 : vector<8x128xf32>
    %cst_28 = arith.constant 0.000000e+00 : f32
    %67 = vector.broadcast %cst_28 : f32 to vector<8x128xf32>
    %68 = arith.maximumf %66, %67 : vector<8x128xf32>
    %69 = arith.truncf %68 : vector<8x128xf32> to vector<8x128xbf16>
    %c1_i32_29 = arith.constant 1 : i32
    %70 = tpu.memref_slice %arg17[%c1_i32_29] : memref<3x!tpu.dma_semaphore, #tpu.memory_space<semaphore_mem>> -> memref<1x!tpu.dma_semaphore, #tpu.memory_space<semaphore_mem>>
    %71 = tpu.memref_squeeze %70 : memref<1x!tpu.dma_semaphore, #tpu.memory_space<semaphore_mem>> -> memref<!tpu.dma_semaphore, #tpu.memory_space<semaphore_mem>>
    tpu.wait_dma2 semaphore(%71 : memref<!tpu.dma_semaphore, #tpu.memory_space<semaphore_mem>>) src(%arg7 : memref<128x128xbf16, #tpu.memory_space<any>>) dst(%arg15 : memref<128x128xbf16, #tpu.memory_space<vmem>>)
    %c0_30 = arith.constant 0 : index
    %c0_31 = arith.constant 0 : index
    %72 = vector.load %arg15[%c0_30, %c0_31] : memref<128x128xbf16, #tpu.memory_space<vmem>>, vector<128x128xbf16>
    %c0_32 = arith.constant 0 : index
    %c0_33 = arith.constant 0 : index
    %73 = vector.load %arg8[%c0_32, %c0_33] : memref<1x128xf32, #tpu.memory_space<vmem>>, vector<1x128xf32>
    %c0_34 = arith.constant 0 : index
    %c0_35 = arith.constant 0 : index
    %74 = vector.load %arg9[%c0_34, %c0_35] : memref<1x128xf32, #tpu.memory_space<vmem>>, vector<1x128xf32>
    %cst_36 = arith.constant dense<0.000000e+00> : vector<8x128xf32>
    %75 = tpu.matmul %69, %72, %cst_36 {dimension_numbers = #tpu.dot_dimension_numbers<[1], [0], [0], [1], [0, 0, 1, 1], [], []>} : vector<8x128xbf16>, vector<128x128xbf16>, vector<8x128xf32> -> vector<8x128xf32>
    %cst_37 = arith.constant dense<0.000000e+00> : vector<128xf32>
    %76 = vector.multi_reduction <add>, %75, %cst_37 [0] : vector<8x128xf32> to vector<128xf32>
    %77 = vector.shape_cast %76 : vector<128xf32> to vector<1x128xf32>
    %cst_38 = arith.constant 8.000000e+00 : f32
    %78 = vector.broadcast %cst_38 : f32 to vector<1x128xf32>
    %79 = arith.divf %77, %78 : vector<1x128xf32>
    %80 = arith.mulf %75, %75 : vector<8x128xf32>
    %cst_39 = arith.constant dense<0.000000e+00> : vector<128xf32>
    %81 = vector.multi_reduction <add>, %80, %cst_39 [0] : vector<8x128xf32> to vector<128xf32>
    %82 = vector.shape_cast %81 : vector<128xf32> to vector<1x128xf32>
    %cst_40 = arith.constant 8.000000e+00 : f32
    %83 = vector.broadcast %cst_40 : f32 to vector<1x128xf32>
    %84 = arith.divf %82, %83 : vector<1x128xf32>
    %85 = arith.mulf %79, %79 : vector<1x128xf32>
    %86 = arith.subf %84, %85 : vector<1x128xf32>
    %cst_41 = arith.constant 0.000000e+00 : f32
    %87 = vector.broadcast %cst_41 : f32 to vector<1x128xf32>
    %88 = arith.maximumf %86, %87 : vector<1x128xf32>
    %cst_42 = arith.constant 9.99999974E-6 : f32
    %89 = vector.broadcast %cst_42 : f32 to vector<1x128xf32>
    %90 = arith.addf %88, %89 : vector<1x128xf32>
    %91 = math.rsqrt %90 : vector<1x128xf32>
    %92 = arith.mulf %73, %91 : vector<1x128xf32>
    %93 = arith.mulf %79, %92 : vector<1x128xf32>
    %94 = arith.subf %74, %93 : vector<1x128xf32>
    %95 = vector.broadcast %92 : vector<1x128xf32> to vector<8x128xf32>
    %96 = arith.mulf %75, %95 : vector<8x128xf32>
    %97 = vector.broadcast %94 : vector<1x128xf32> to vector<8x128xf32>
    %98 = arith.addf %96, %97 : vector<8x128xf32>
    %cst_43 = arith.constant 0.000000e+00 : f32
    %99 = vector.broadcast %cst_43 : f32 to vector<8x128xf32>
    %100 = arith.maximumf %98, %99 : vector<8x128xf32>
    %101 = arith.truncf %100 : vector<8x128xf32> to vector<8x128xbf16>
    %c2_i32_44 = arith.constant 2 : i32
    %102 = tpu.memref_slice %arg17[%c2_i32_44] : memref<3x!tpu.dma_semaphore, #tpu.memory_space<semaphore_mem>> -> memref<1x!tpu.dma_semaphore, #tpu.memory_space<semaphore_mem>>
    %103 = tpu.memref_squeeze %102 : memref<1x!tpu.dma_semaphore, #tpu.memory_space<semaphore_mem>> -> memref<!tpu.dma_semaphore, #tpu.memory_space<semaphore_mem>>
    tpu.wait_dma2 semaphore(%103 : memref<!tpu.dma_semaphore, #tpu.memory_space<semaphore_mem>>) src(%arg10 : memref<128x128xbf16, #tpu.memory_space<any>>) dst(%arg16 : memref<128x128xbf16, #tpu.memory_space<vmem>>)
    %c0_45 = arith.constant 0 : index
    %c0_46 = arith.constant 0 : index
    %104 = vector.load %arg16[%c0_45, %c0_46] : memref<128x128xbf16, #tpu.memory_space<vmem>>, vector<128x128xbf16>
    %c0_47 = arith.constant 0 : index
    %c0_48 = arith.constant 0 : index
    %105 = vector.load %arg11[%c0_47, %c0_48] : memref<1x128xf32, #tpu.memory_space<vmem>>, vector<1x128xf32>
    %c0_49 = arith.constant 0 : index
    %c0_50 = arith.constant 0 : index
    %106 = vector.load %arg12[%c0_49, %c0_50] : memref<1x128xf32, #tpu.memory_space<vmem>>, vector<1x128xf32>
    %cst_51 = arith.constant dense<0.000000e+00> : vector<8x128xf32>
    %107 = tpu.matmul %101, %104, %cst_51 {dimension_numbers = #tpu.dot_dimension_numbers<[1], [0], [0], [1], [0, 0, 1, 1], [], []>} : vector<8x128xbf16>, vector<128x128xbf16>, vector<8x128xf32> -> vector<8x128xf32>
    %cst_52 = arith.constant dense<0.000000e+00> : vector<128xf32>
    %108 = vector.multi_reduction <add>, %107, %cst_52 [0] : vector<8x128xf32> to vector<128xf32>
    %109 = vector.shape_cast %108 : vector<128xf32> to vector<1x128xf32>
    %cst_53 = arith.constant 8.000000e+00 : f32
    %110 = vector.broadcast %cst_53 : f32 to vector<1x128xf32>
    %111 = arith.divf %109, %110 : vector<1x128xf32>
    %112 = arith.mulf %107, %107 : vector<8x128xf32>
    %cst_54 = arith.constant dense<0.000000e+00> : vector<128xf32>
    %113 = vector.multi_reduction <add>, %112, %cst_54 [0] : vector<8x128xf32> to vector<128xf32>
    %114 = vector.shape_cast %113 : vector<128xf32> to vector<1x128xf32>
    %cst_55 = arith.constant 8.000000e+00 : f32
    %115 = vector.broadcast %cst_55 : f32 to vector<1x128xf32>
    %116 = arith.divf %114, %115 : vector<1x128xf32>
    %117 = arith.mulf %111, %111 : vector<1x128xf32>
    %118 = arith.subf %116, %117 : vector<1x128xf32>
    %cst_56 = arith.constant 0.000000e+00 : f32
    %119 = vector.broadcast %cst_56 : f32 to vector<1x128xf32>
    %120 = arith.maximumf %118, %119 : vector<1x128xf32>
    %cst_57 = arith.constant 9.99999974E-6 : f32
    %121 = vector.broadcast %cst_57 : f32 to vector<1x128xf32>
    %122 = arith.addf %120, %121 : vector<1x128xf32>
    %123 = math.rsqrt %122 : vector<1x128xf32>
    %124 = arith.mulf %105, %123 : vector<1x128xf32>
    %125 = arith.mulf %111, %124 : vector<1x128xf32>
    %126 = arith.subf %106, %125 : vector<1x128xf32>
    %127 = vector.broadcast %124 : vector<1x128xf32> to vector<8x128xf32>
    %128 = arith.mulf %107, %127 : vector<8x128xf32>
    %129 = vector.broadcast %126 : vector<1x128xf32> to vector<8x128xf32>
    %130 = arith.addf %128, %129 : vector<8x128xf32>
    %c0_58 = arith.constant 0 : index
    %c0_59 = arith.constant 0 : index
    %131 = vector.load %arg0[%c0_58, %c0_59] : memref<8x128xf32, #tpu.memory_space<vmem>>, vector<8x128xf32>
    %132 = arith.addf %130, %131 : vector<8x128xf32>
    %cst_60 = arith.constant 0.000000e+00 : f32
    %133 = vector.broadcast %cst_60 : f32 to vector<8x128xf32>
    %134 = arith.maximumf %132, %133 : vector<8x128xf32>
    %c0_61 = arith.constant 0 : index
    %c0_62 = arith.constant 0 : index
    %135 = vector.load %arg13[%c0_61, %c0_62] : memref<8x128xf32, #tpu.memory_space<vmem>>, vector<8x128xf32>
    tpu.vector_store %arg13[%c0_61, %c0_62], %134 {strides = array<i32>} : memref<8x128xf32, #tpu.memory_space<vmem>>, vector<8x128xf32>,
    return
  }
}

</mosaic_0001>

<llo_original>
// kernel: tpu_custom_call.1
$region0: #{tpu_custom_call.1}
  #allocation0 [shape = 'u32[]', space=smem, size = 0x4, offset = 0x4, fixed_abs, tag = 'smem constant byte address 0x4 - core index']
  #allocation1 [shape = 'u32[144,128]{1,0:T(1,128)}', space=vmem, size = 0x12000, scoped, tag = 'internal scratch']
  #allocation2 [shape = 'bf16[128,128]{1,0:T(16,128)(2,1)}', space=vmem, size = 0x8000, scoped, tag = 'scratch operand']
  #allocation3 [shape = 'bf16[128,128]{1,0:T(16,128)(2,1)}', space=vmem, size = 0x8000, scoped, tag = 'scratch operand']
  #allocation4 [shape = 'bf16[128,128]{1,0:T(16,128)(2,1)}', space=vmem, size = 0x8000, scoped, tag = 'scratch operand']
  #allocation5 [shape = 's32[3]{0}', space=sflag, size = 0xc, scoped, tag = 'scratch operand']
  #allocation24 [shape = 's32[]', space=sflag, size = 0x4, offset = 0, fixed_abs, tag = 'sflag constant byte address 0x0 - dummy sync flag']
  #allocation25 [shape = 's32[]', space=sflag, size = 0x4, offset = 0, fixed_abs, tag = 'sflag constant byte address 0x0 - dummy sync flag']
  #allocation26 [shape = 'u32[]', space=smem, size = 0x4, offset = 0x44, fixed_abs, tag = 'smem constant byte address 0x44 - assertion arg 0']
  #allocation27 [shape = 'u32[]', space=smem, size = 0x4, offset = 0x48, fixed_abs, tag = 'smem constant byte address 0x48 - assertion arg 1']
  #allocation28 [shape = 's32[]', space=sflag, size = 0x4, offset = 0, fixed_abs, tag = 'sflag constant byte address 0x0 - dummy sync flag']
  #allocation29 [shape = 's32[]', space=sflag, size = 0x4, offset = 0, fixed_abs, tag = 'sflag constant byte address 0x0 - dummy sync flag']
  #allocation30 [shape = 's32[]', space=sflag, size = 0x4, offset = 0, fixed_abs, tag = 'sflag constant byte address 0x0 - dummy sync flag']
  #allocation31 [shape = 's32[]', space=sflag, size = 0x4, offset = 0, fixed_abs, tag = 'sflag constant byte address 0x0 - dummy sync flag']
  %s0 = inlined_call_operand.hbm [shape: f32[8,128], index: 0, kind: input, shape index: {}, may-alias: {0,13}]
  %s1 = inlined_call_operand.hbm [shape: bf16[128,128], index: 1, kind: input, shape index: {}]
  %s2 = inlined_call_operand.hbm [shape: f32[1,128], index: 2, kind: input, shape index: {}]
  %s3 = inlined_call_operand.hbm [shape: f32[1,128], index: 3, kind: input, shape index: {}]
  %s4 = inlined_call_operand.hbm [shape: bf16[128,128], index: 4, kind: input, shape index: {}]
  %s5 = inlined_call_operand.hbm [shape: f32[1,128], index: 5, kind: input, shape index: {}]
  %s6 = inlined_call_operand.hbm [shape: f32[1,128], index: 6, kind: input, shape index: {}]
  %s7 = inlined_call_operand.hbm [shape: bf16[128,128], index: 7, kind: input, shape index: {}]
  %s8 = inlined_call_operand.hbm [shape: f32[1,128], index: 8, kind: input, shape index: {}]
  %s9 = inlined_call_operand.hbm [shape: f32[1,128], index: 9, kind: input, shape index: {}]
  %s10 = inlined_call_operand.hbm [shape: bf16[128,128], index: 10, kind: input, shape index: {}]
  %s11 = inlined_call_operand.hbm [shape: f32[1,128], index: 11, kind: input, shape index: {}]
  %s12 = inlined_call_operand.hbm [shape: f32[1,128], index: 12, kind: input, shape index: {}]
  %s13 = inlined_call_operand.hbm [shape: f32[8,128], index: 13, kind: output, shape index: {}, may-alias: {0,13}]
  %s14 = sld [smem:[#allocation0]]
  $region102: #{tpu_custom_call.1} parent=0
    _
  %s16 = ssub.s32 1, %s14
  %s17 = scalar_select 0, %s16, %s14
  $region1: #{tpu_custom_call.1} parent=0
    #allocation6 [shape = 'u8[4096]{0}', space=vmem, size = 0x1000, scoped, tag = 'input window, operand 0, single buffered']
    #allocation7 [shape = 's32[1]{0}', space=sflag, size = 0x4, scoped, tag = 'scoped memory for tpu_custom_call.1']
    #allocation8 [shape = 's32[1]{0}', space=sflag, size = 0x4, scoped, tag = 'scoped memory for tpu_custom_call.1']
    #allocation9 [shape = 'u8[32768]{0}', space=vmem, size = 0x8000, scoped, tag = 'input window, operand 1, single buffered']
    #allocation10 [shape = 's32[1]{0}', space=sflag, size = 0x4, scoped, tag = 'scoped memory for tpu_custom_call.1']
    #allocation11 [shape = 'u8[512]{0}', space=vmem, size = 0x400, scoped, tag = 'input window, operand 2, single buffered']
    #allocation12 [shape = 'u8[512]{0}', space=vmem, size = 0x400, scoped, tag = 'input window, operand 3, single buffered']
    #allocation13 [shape = 's32[1]{0}', space=sflag, size = 0x4, scoped, tag = 'scoped memory for tpu_custom_call.1']
    #allocation14 [shape = 'u8[512]{0}', space=vmem, size = 0x400, scoped, tag = 'input window, operand 5, single buffered']
    #allocation15 [shape = 'u8[512]{0}', space=vmem, size = 0x400, scoped, tag = 'input window, operand 6, single buffered']
    #allocation16 [shape = 's32[1]{0}', space=sflag, size = 0x4, scoped, tag = 'scoped memory for tpu_custom_call.1']
    #allocation17 [shape = 'u8[512]{0}', space=vmem, size = 0x400, scoped, tag = 'input window, operand 8, single buffered']
    #allocation18 [shape = 'u8[512]{0}', space=vmem, size = 0x400, scoped, tag = 'input window, operand 9, single buffered']
    #allocation19 [shape = 's32[1]{0}', space=sflag, size = 0x4, scoped, tag = 'scoped memory for tpu_custom_call.1']
    #allocation20 [shape = 'u8[512]{0}', space=vmem, size = 0x400, scoped, tag = 'input window, operand 11, single buffered']
    #allocation21 [shape = 'u8[512]{0}', space=vmem, size = 0x400, scoped, tag = 'input window, operand 12, single buffered']
    #allocation22 [shape = 's32[1]{0}', space=sflag, size = 0x4, scoped, tag = 'scoped memory for tpu_custom_call.1']
    #allocation23 [shape = 'u8[4096]{0}', space=vmem, size = 0x1000, scoped, tag = 'output window, operand 0, single buffered']
    %18 = vsyncpa [#allocation7], 0
    %19 = vsyncpa [#allocation10], 0
    %20 = vsyncpa [#allocation13], 0
    %21 = vsyncpa [#allocation16], 0
    %22 = vsyncpa [#allocation19], 0
    %23 = vsyncpa [#allocation22], 0
    %24 = vsyncpa [#allocation8], 0
    // Predicated region
    $region2: #{tpu_custom_call.1} parent=1 // pred_check
      _
    $region3: #{tpu_custom_call.1} parent=1 // pred_check_branch
      %26 = sbr.rel (0) target = $region5
    $region4: #{tpu_custom_call.1} parent=1 // pred_region
      %s28 = ssub.s32 128, 128
      %29 = vsyncadd [#allocation7], %s28
      %s31 = sshll.u32 [#allocation6], 4
      %s32 = int_to_ptr.vmem [resolvable:$true] %s31
      %34 = dma.hbm_to_vmem [thread:$0]  %s0, 128, %s32, [#allocation7]
    $region5: #{tpu_custom_call.1} parent=1 // pred_fallthru
      _
    // Predicated region
    $region6: #{tpu_custom_call.1} parent=1 // pred_check
      _
    $region7: #{tpu_custom_call.1} parent=1 // pred_check_branch
      %36 = sbr.rel (0) target = $region9
    $region8: #{tpu_custom_call.1} parent=1 // pred_region
      %s38 = ssub.s32 1024, 1024
      %39 = vsyncadd [#allocation10], %s38
      %s40 = sshll.u32 [#allocation9], 4
      %s41 = int_to_ptr.vmem [resolvable:$true] %s40
      %46 = dma.hbm_to_vmem [thread:$0]  %s1, 1024, %s41, [#allocation10], 64, 64, 4
    $region9: #{tpu_custom_call.1} parent=1 // pred_fallthru
      _
    // Predicated region
    $region10: #{tpu_custom_call.1} parent=1 // pred_check
      _
    $region11: #{tpu_custom_call.1} parent=1 // pred_check_branch
      %48 = sbr.rel (0) target = $region13
    $region12: #{tpu_custom_call.1} parent=1 // pred_region
      %s50 = ssub.s32 16, 16
      %51 = vsyncadd [#allocation10], %s50
      %s53 = sshll.u32 [#allocation11], 4
      %s54 = int_to_ptr.vmem [resolvable:$true] %s53
      %56 = dma.hbm_to_vmem [thread:$0]  %s2, 16, %s54, [#allocation10]
    $region13: #{tpu_custom_call.1} parent=1 // pred_fallthru
      _
    // Predicated region
    $region14: #{tpu_custom_call.1} parent=1 // pred_check
      _
    $region15: #{tpu_custom_call.1} parent=1 // pred_check_branch
      %58 = sbr.rel (0) target = $region17
    $region16: #{tpu_custom_call.1} parent=1 // pred_region
      %s60 = ssub.s32 16, 16
      %61 = vsyncadd [#allocation13], %s60
      %s63 = sshll.u32 [#allocation12], 4
      %s64 = int_to_ptr.vmem [resolvable:$true] %s63
      %66 = dma.hbm_to_vmem [thread:$0]  %s3, 16, %s64, [#allocation13]
    $region17: #{tpu_custom_call.1} parent=1 // pred_fallthru
      _
    // Predicated region
    $region18: #{tpu_custom_call.1} parent=1 // pred_check
      _
    $region19: #{tpu_custom_call.1} parent=1 // pred_check_branch
      %68 = sbr.rel (0) target = $region21
    $region20: #{tpu_custom_call.1} parent=1 // pred_region
      %s70 = ssub.s32 16, 16
      %71 = vsyncadd [#allocation13], %s70
      %s73 = sshll.u32 [#allocation14], 4
      %s74 = int_to_ptr.vmem [resolvable:$true] %s73
      %76 = dma.hbm_to_vmem [thread:$0]  %s5, 16, %s74, [#allocation13]
    $region21: #{tpu_custom_call.1} parent=1 // pred_fallthru
      _
    // Predicated region
    $region22: #{tpu_custom_call.1} parent=1 // pred_check
      _
    $region23: #{tpu_custom_call.1} parent=1 // pred_check_branch
      %78 = sbr.rel (0) target = $region25
    $region24: #{tpu_custom_call.1} parent=1 // pred_region
      %s80 = ssub.s32 16, 16
      %81 = vsyncadd [#allocation16], %s80
      %s83 = sshll.u32 [#allocation15], 4
      %s84 = int_to_ptr.vmem [resolvable:$true] %s83
      %86 = dma.hbm_to_vmem [thread:$0]  %s6, 16, %s84, [#allocation16]
    $region25: #{tpu_custom_call.1} parent=1 // pred_fallthru
      _
    // Predicated region
    $region26: #{tpu_custom_call.1} parent=1 // pred_check
      _
    $region27: #{tpu_custom_call.1} parent=1 // pred_check_branch
      %88 = sbr.rel (0) target = $region29
    $region28: #{tpu_custom_call.1} parent=1 // pred_region
      %s90 = ssub.s32 16, 16
      %91 = vsyncadd [#allocation16], %s90
      %s93 = sshll.u32 [#allocation17], 4
      %s94 = int_to_ptr.vmem [resolvable:$true] %s93
      %96 = dma.hbm_to_vmem [thread:$0]  %s8, 16, %s94, [#allocation16]
    $region29: #{tpu_custom_call.1} parent=1 // pred_fallthru
      _
    // Predicated region
    $region30: #{tpu_custom_call.1} parent=1 // pred_check
      _
    $region31: #{tpu_custom_call.1} parent=1 // pred_check_branch
      %98 = sbr.rel (0) target = $region33
    $region32: #{tpu_custom_call.1} parent=1 // pred_region
      %s100 = ssub.s32 16, 16
      %101 = vsyncadd [#allocation19], %s100
      %s103 = sshll.u32 [#allocation18], 4
      %s104 = int_to_ptr.vmem [resolvable:$true] %s103
      %106 = dma.hbm_to_vmem [thread:$0]  %s9, 16, %s104, [#allocation19]
    $region33: #{tpu_custom_call.1} parent=1 // pred_fallthru
      _
    // Predicated region
    $region34: #{tpu_custom_call.1} parent=1 // pred_check
      _
    $region35: #{tpu_custom_call.1} parent=1 // pred_check_branch
      %108 = sbr.rel (0) target = $region37
    $region36: #{tpu_custom_call.1} parent=1 // pred_region
      %s110 = ssub.s32 16, 16
      %111 = vsyncadd [#allocation19], %s110
      %s113 = sshll.u32 [#allocation20], 4
      %s114 = int_to_ptr.vmem [resolvable:$true] %s113
      %116 = dma.hbm_to_vmem [thread:$0]  %s11, 16, %s114, [#allocation19]
    $region37: #{tpu_custom_call.1} parent=1 // pred_fallthru
      _
    // Predicated region
    $region38: #{tpu_custom_call.1} parent=1 // pred_check
      _
    $region39: #{tpu_custom_call.1} parent=1 // pred_check_branch
      %118 = sbr.rel (0) target = $region41
    $region40: #{tpu_custom_call.1} parent=1 // pred_region
      %s120 = ssub.s32 16, 16
      %121 = vsyncadd [#allocation22], %s120
      %s123 = sshll.u32 [#allocation21], 4
      %s124 = int_to_ptr.vmem [resolvable:$true] %s123
      %126 = dma.hbm_to_vmem [thread:$0]  %s12, 16, %s124, [#allocation22]
    $region41: #{tpu_custom_call.1} parent=1 // pred_fallthru
      _
    // Predicated region
    $region42: #{tpu_custom_call.1} parent=1 // pred_check
      _
    $region43: #{tpu_custom_call.1} parent=1 // pred_check_branch
      %128 = sbr.rel (0) target = $region45
    $region44: #{tpu_custom_call.1} parent=1 // pred_region
      %129 = dma.done [#allocation7], 128
    $region45: #{tpu_custom_call.1} parent=1 // pred_fallthru
      _
    // Predicated region
    $region46: #{tpu_custom_call.1} parent=1 // pred_check
      _
    $region47: #{tpu_custom_call.1} parent=1 // pred_check_branch
      %131 = sbr.rel (0) target = $region49
    $region48: #{tpu_custom_call.1} parent=1 // pred_region
      %132 = dma.done [#allocation10], 1024
    $region49: #{tpu_custom_call.1} parent=1 // pred_fallthru
      _
    // Predicated region
    $region50: #{tpu_custom_call.1} parent=1 // pred_check
      _
    $region51: #{tpu_custom_call.1} parent=1 // pred_check_branch
      %134 = sbr.rel (0) target = $region53
    $region52: #{tpu_custom_call.1} parent=1 // pred_region
      %135 = dma.done [#allocation10], 16
    $region53: #{tpu_custom_call.1} parent=1 // pred_fallthru
      _
    // Predicated region
    $region54: #{tpu_custom_call.1} parent=1 // pred_check
      _
    $region55: #{tpu_custom_call.1} parent=1 // pred_check_branch
      %137 = sbr.rel (0) target = $region57
    $region56: #{tpu_custom_call.1} parent=1 // pred_region
      %138 = dma.done [#allocation13], 16
    $region57: #{tpu_custom_call.1} parent=1 // pred_fallthru
      _
    // Predicated region
    $region58: #{tpu_custom_call.1} parent=1 // pred_check
      _
    $region59: #{tpu_custom_call.1} parent=1 // pred_check_branch
      %140 = sbr.rel (0) target = $region61
    $region60: #{tpu_custom_call.1} parent=1 // pred_region
      %141 = dma.done [#allocation13], 16
    $region61: #{tpu_custom_call.1} parent=1 // pred_fallthru
      _
    // Predicated region
    $region62: #{tpu_custom_call.1} parent=1 // pred_check
      _
    $region63: #{tpu_custom_call.1} parent=1 // pred_check_branch
      %143 = sbr.rel (0) target = $region65
    $region64: #{tpu_custom_call.1} parent=1 // pred_region
      %144 = dma.done [#allocation16], 16
    $region65: #{tpu_custom_call.1} parent=1 // pred_fallthru
      _
    // Predicated region
    $region66: #{tpu_custom_call.1} parent=1 // pred_check
      _
    $region67: #{tpu_custom_call.1} parent=1 // pred_check_branch
      %146 = sbr.rel (0) target = $region69
    $region68: #{tpu_custom_call.1} parent=1 // pred_region
      %147 = dma.done [#allocation16], 16
    $region69: #{tpu_custom_call.1} parent=1 // pred_fallthru
      _
    // Predicated region
    $region70: #{tpu_custom_call.1} parent=1 // pred_check
      _
    $region71: #{tpu_custom_call.1} parent=1 // pred_check_branch
      %149 = sbr.rel (0) target = $region73
    $region72: #{tpu_custom_call.1} parent=1 // pred_region
      %150 = dma.done [#allocation19], 16
    $region73: #{tpu_custom_call.1} parent=1 // pred_fallthru
      _
    // Predicated region
    $region74: #{tpu_custom_call.1} parent=1 // pred_check
      _
    $region75: #{tpu_custom_call.1} parent=1 // pred_check_branch
      %152 = sbr.rel (0) target = $region77
    $region76: #{tpu_custom_call.1} parent=1 // pred_region
      %153 = dma.done [#allocation19], 16
    $region77: #{tpu_custom_call.1} parent=1 // pred_fallthru
      _
    // Predicated region
    $region78: #{tpu_custom_call.1} parent=1 // pred_check
      _
    $region79: #{tpu_custom_call.1} parent=1 // pred_check_branch
      %155 = sbr.rel (0) target = $region81
    $region80: #{tpu_custom_call.1} parent=1 // pred_region
      %156 = dma.done [#allocation22], 16
    $region81: #{tpu_custom_call.1} parent=1 // pred_fallthru
      _
    // Predicated region
    $region82: #{tpu_custom_call.1} parent=1 // pred_check
      _
    $region83: #{tpu_custom_call.1} parent=1 // pred_check_branch
      %159 = sbr.rel target = $region85
    $region84: #{tpu_custom_call.1} parent=1 // pred_region
      %160 = sst [smem:[#allocation26]] [#allocation25]
      %161 = sst [smem:[#allocation27]] [#allocation24]
    $region85: #{tpu_custom_call.1} parent=1 // pred_fallthru
      _
    %163 = shalt.err (0)
    %s165 = sshll.u32 [#allocation2], 4
    %s166 = int_to_ptr.vmem [resolvable:$true] %s165
    %168 = dma.hbm_to_vmem [thread:$0]  %s4, 1024, %s166, [#allocation5]
    %s169 = scalar_lea.sflag [#allocation5], 1
    // Predicated region
    $region86: #{tpu_custom_call.1} parent=1 // pred_check
      _
    $region87: #{tpu_custom_call.1} parent=1 // pred_check_branch
      %171 = sbr.rel target = $region89
    $region88: #{tpu_custom_call.1} parent=1 // pred_region
      %172 = sst [smem:[#allocation26]] [#allocation29]
      %173 = sst [smem:[#allocation27]] [#allocation28]
    $region89: #{tpu_custom_call.1} parent=1 // pred_fallthru
      _
    %175 = shalt.err (0)
    %s177 = sshll.u32 [#allocation3], 4
    %s178 = int_to_ptr.vmem [resolvable:$true] %s177
    %180 = dma.hbm_to_vmem [thread:$0]  %s7, 1024, %s178, %s169
    %s181 = scalar_lea.sflag [#allocation5], 2
    // Predicated region
    $region90: #{tpu_custom_call.1} parent=1 // pred_check
      _
    $region91: #{tpu_custom_call.1} parent=1 // pred_check_branch
      %183 = sbr.rel target = $region93
    $region92: #{tpu_custom_call.1} parent=1 // pred_region
      %184 = sst [smem:[#allocation26]] [#allocation31]
      %185 = sst [smem:[#allocation27]] [#allocation30]
    $region93: #{tpu_custom_call.1} parent=1 // pred_fallthru
      _
    %187 = shalt.err (0)
    %s189 = sshll.u32 [#allocation4], 4
    %s190 = int_to_ptr.vmem [resolvable:$true] %s189
    %192 = dma.hbm_to_vmem [thread:$0]  %s10, 1024, %s190, %s181
    %v193 = vld [vmem:[#allocation6] sm:$0xff]
    %v194 = vpack.c.bf16 %v193, %v193
    %v195 = vld [vmem:[#allocation9] sm:$0xf]
    %v196 = vld [vmem:[#allocation9 + $0x4] sm:$0xf]
    %v197 = vld [vmem:[#allocation9 + $0x8] sm:$0xf]
    %v198 = vld [vmem:[#allocation9 + $0xc] sm:$0xf]
    %v199 = vld [vmem:[#allocation9 + $0x10] sm:$0xf]
    %v200 = vld [vmem:[#allocation9 + $0x14] sm:$0xf]
    %v201 = vld [vmem:[#allocation9 + $0x18] sm:$0xf]
    %v202 = vld [vmem:[#allocation9 + $0x1c] sm:$0xf]
    %v203 = vld [vmem:[#allocation9 + $0x20] sm:$0xf]
    %v204 = vld [vmem:[#allocation9 + $0x24] sm:$0xf]
    %v205 = vld [vmem:[#allocation9 + $0x28] sm:$0xf]
    %v206 = vld [vmem:[#allocation9 + $0x2c] sm:$0xf]
    %v207 = vld [vmem:[#allocation9 + $0x30] sm:$0xf]
    %v208 = vld [vmem:[#allocation9 + $0x34] sm:$0xf]
    %v209 = vld [vmem:[#allocation9 + $0x38] sm:$0xf]
    %v210 = vld [vmem:[#allocation9 + $0x3c] sm:$0xf]
    %v211 = vld [vmem:[#allocation11] sm:$0x1]
    %v212 = vld [vmem:[#allocation12] sm:$0x1]
    %v229 = vunpack.c.l.b16 %v195
    %v230 = vunpack.c.l.b16 %v196
    %v231 = vunpack.c.l.b16 %v197
    %v232 = vunpack.c.l.b16 %v198
    %v233 = vunpack.c.l.b16 %v199
    %v234 = vunpack.c.l.b16 %v200
    %v235 = vunpack.c.l.b16 %v201
    %v236 = vunpack.c.l.b16 %v202
    %v237 = vunpack.c.l.b16 %v203
    %v238 = vunpack.c.l.b16 %v204
    %v239 = vunpack.c.l.b16 %v205
    %v240 = vunpack.c.l.b16 %v206
    %v241 = vunpack.c.l.b16 %v207
    %v242 = vunpack.c.l.b16 %v208
    %v243 = vunpack.c.l.b16 %v209
    %v244 = vunpack.c.l.b16 %v210
    %v245 = vpack.c.b16 %v230, %v229
    %v246 = vpack.c.b16 %v232, %v231
    %v247 = vpack.c.b16 %v234, %v233
    %v248 = vpack.c.b16 %v236, %v235
    %v249 = vpack.c.b16 %v238, %v237
    %v250 = vpack.c.b16 %v240, %v239
    %v251 = vpack.c.b16 %v242, %v241
    %v252 = vpack.c.b16 %v244, %v243
    %261 = vmatprep.subr.bf16.mxu0 0
    %262 = vmatpush1.bf16.msra.mxu0 %v245
    %263 = vmatprep.subr.bf16.mxu0 0
    %264 = vmatpush1.bf16.msra.mxu0 %v246
    %265 = vmatprep.subr.bf16.mxu0 0
    %266 = vmatpush1.bf16.msra.mxu0 %v247
    %267 = vmatprep.subr.bf16.mxu0 0
    %268 = vmatpush1.bf16.msra.mxu0 %v248
    %269 = vmatprep.subr.bf16.mxu0 0
    %270 = vmatpush1.bf16.msra.mxu0 %v249
    %271 = vmatprep.subr.bf16.mxu0 0
    %272 = vmatpush1.bf16.msra.mxu0 %v250
    %273 = vmatprep.subr.bf16.mxu0 0
    %274 = vmatpush1.bf16.msra.mxu0 %v251
    %275 = vmatprep.subr.bf16.mxu0 0
    %276 = vmatpush1.bf16.msra.mxu0 %v252
    %277 = vmatprep.subr.bf16.mxu0 0
    %278 = vmatpush1.bf16.msra.mxu0 0
    %279 = vmatprep.subr.bf16.mxu0 0
    %280 = vmatpush1.bf16.msra.mxu0 0
    %281 = vmatprep.subr.bf16.mxu0 0
    %282 = vmatpush1.bf16.msra.mxu0 0
    %283 = vmatprep.subr.bf16.mxu0 0
    %284 = vmatpush1.bf16.msra.mxu0 0
    %285 = vmatprep.subr.bf16.mxu0 0
    %286 = vmatpush1.bf16.msra.mxu0 0
    %287 = vmatprep.subr.bf16.mxu0 0
    %288 = vmatpush1.bf16.msra.mxu0 0
    %289 = vmatprep.subr.bf16.mxu0 0
    %290 = vmatpush1.bf16.msra.mxu0 0
    %291 = vmatprep.subr.bf16.mxu0 0
    %292 = vmatpush1.bf16.msra.mxu0 0
    %293 = vmatprep.mubr.bf16.mxu0 0
    %294 = vmatmul.mubr.bf16.gmra.mrb[0].mxu0 %v194
    %v295 = vpop.f32.mrb[0].mxu0
    %v296 = vadd.f32 0.0, %v295
    %v297 = vpop.f32.mrb[0].mxu0
    %v298 = vpop.f32.mrb[0].mxu0
    %v299 = vpop.f32.mrb[0].mxu0
    %300 = vdwg.mxu0
    %v301 = vrot.slane %v296, 4
    %v302 = vadd.f32 %v296, %v301
    %v303 = vrot.slane %v302, 2
    %v304 = vadd.f32 %v302, %v303
    %v305 = vrot.slane %v304, 1
    %v306 = vadd.f32 %v304, %v305
    %v307 = vrcp.pop 8.0
    %v308 = vmul.f32 %v306, %v307
    %v309 = vmul.f32 %v296, %v296
    %v310 = vrot.slane %v309, 4
    %v311 = vadd.f32 %v309, %v310
    %v312 = vrot.slane %v311, 2
    %v313 = vadd.f32 %v311, %v312
    %v314 = vrot.slane %v313, 1
    %v315 = vadd.f32 %v313, %v314
    %v316 = vmul.f32 %v315, %v307
    %v317 = vmul.f32 %v308, %v308
    %v318 = vsub.f32 %v316, %v317
    %v319 = vmax.f32 %v318, 0.0
    %v320 = vadd.f32 %v319, 1e-05
    %v321 = vrsqrt.pop %v320
    %v322 = vmul.f32 %v211, %v321
    %v323 = vmul.f32 %v308, %v322
    %v324 = vsub.f32 %v212, %v323
    %v326 = vlaneseq
    %v327 = vshrl.u32 %v326, 7
    %v328 = vsub.s32 0, %v327
    %v329 = vrot.slane %v322, %v328
    %v331 = vmul.f32 %v296, %v329
    %v333 = vlaneseq
    %v334 = vshrl.u32 %v333, 7
    %v335 = vsub.s32 0, %v334
    %v336 = vrot.slane %v324, %v335
    %v338 = vadd.f32 %v331, %v336
    %v339 = vmax.f32 %v338, 0.0
    %v340 = vpack.c.bf16 %v339, %v339
    %s341 = smul.u32 4, 16
    %s342 = smul.u32 %s341, 1
    %s343 = sshll.u32 %s342, 4
    %344 = dma.done [#allocation5], %s343
    %v345 = vld [vmem:[#allocation2] sm:$0xff]
    %v346 = vld [vmem:[#allocation2 + $0x8] sm:$0xff]
    %v347 = vld [vmem:[#allocation2 + $0x10] sm:$0xff]
    %v348 = vld [vmem:[#allocation2 + $0x18] sm:$0xff]
    %v349 = vld [vmem:[#allocation2 + $0x20] sm:$0xff]
    %v350 = vld [vmem:[#allocation2 + $0x28] sm:$0xff]
    %v351 = vld [vmem:[#allocation2 + $0x30] sm:$0xff]
    %v352 = vld [vmem:[#allocation2 + $0x38] sm:$0xff]
    %v353 = vld [vmem:[#allocation14] sm:$0x1]
    %v354 = vld [vmem:[#allocation15] sm:$0x1]
    %355 = vmatprep.subr.bf16.mxu0 0
    %356 = vmatpush1.bf16.msra.mxu0 %v345
    %357 = vmatprep.subr.bf16.mxu0 0
    %358 = vmatpush1.bf16.msra.mxu0 %v346
    %359 = vmatprep.subr.bf16.mxu0 0
    %360 = vmatpush1.bf16.msra.mxu0 %v347
    %361 = vmatprep.subr.bf16.mxu0 0
    %362 = vmatpush1.bf16.msra.mxu0 %v348
    %363 = vmatprep.subr.bf16.mxu0 0
    %364 = vmatpush1.bf16.msra.mxu0 %v349
    %365 = vmatprep.subr.bf16.mxu0 0
    %366 = vmatpush1.bf16.msra.mxu0 %v350
    %367 = vmatprep.subr.bf16.mxu0 0
    %368 = vmatpush1.bf16.msra.mxu0 %v351
    %369 = vmatprep.subr.bf16.mxu0 0
    %370 = vmatpush1.bf16.msra.mxu0 %v352
    %371 = vmatprep.subr.bf16.mxu0 0
    %372 = vmatpush1.bf16.msra.mxu0 0
    %373 = vmatprep.subr.bf16.mxu0 0
    %374 = vmatpush1.bf16.msra.mxu0 0
    %375 = vmatprep.subr.bf16.mxu0 0
    %376 = vmatpush1.bf16.msra.mxu0 0
    %377 = vmatprep.subr.bf16.mxu0 0
    %378 = vmatpush1.bf16.msra.mxu0 0
    %379 = vmatprep.subr.bf16.mxu0 0
    %380 = vmatpush1.bf16.msra.mxu0 0
    %381 = vmatprep.subr.bf16.mxu0 0
    %382 = vmatpush1.bf16.msra.mxu0 0
    %383 = vmatprep.subr.bf16.mxu0 0
    %384 = vmatpush1.bf16.msra.mxu0 0
    %385 = vmatprep.subr.bf16.mxu0 0
    %386 = vmatpush1.bf16.msra.mxu0 0
    %387 = vmatprep.mubr.bf16.mxu0 0
    %388 = vmatmul.mubr.bf16.gmra.mrb[0].mxu0 %v340
    %v389 = vpop.f32.mrb[0].mxu0
    %v390 = vadd.f32 0.0, %v389
    %v391 = vpop.f32.mrb[0].mxu0
    %v392 = vpop.f32.mrb[0].mxu0
    %v393 = vpop.f32.mrb[0].mxu0
    %394 = vdwg.mxu0
    %v395 = vrot.slane %v390, 4
    %v396 = vadd.f32 %v390, %v395
    %v397 = vrot.slane %v396, 2
    %v398 = vadd.f32 %v396, %v397
    %v399 = vrot.slane %v398, 1
    %v400 = vadd.f32 %v398, %v399
    %v401 = vmul.f32 %v400, %v307
    %v402 = vmul.f32 %v390, %v390
    %v403 = vrot.slane %v402, 4
    %v404 = vadd.f32 %v402, %v403
    %v405 = vrot.slane %v404, 2
    %v406 = vadd.f32 %v404, %v405
    %v407 = vrot.slane %v406, 1
    %v408 = vadd.f32 %v406, %v407
    %v409 = vmul.f32 %v408, %v307
    %v410 = vmul.f32 %v401, %v401
    %v411 = vsub.f32 %v409, %v410
    %v412 = vmax.f32 %v411, 0.0
    %v413 = vadd.f32 %v412, 1e-05
    %v414 = vrsqrt.pop %v413
    %v415 = vmul.f32 %v353, %v414
    %v416 = vmul.f32 %v401, %v415
    %v417 = vsub.f32 %v354, %v416
    %v419 = vlaneseq
    %v420 = vshrl.u32 %v419, 7
    %v421 = vsub.s32 0, %v420
    %v422 = vrot.slane %v415, %v421
    %v424 = vmul.f32 %v390, %v422
    %v426 = vlaneseq
    %v427 = vshrl.u32 %v426, 7
    %v428 = vsub.s32 0, %v427
    %v429 = vrot.slane %v417, %v428
    %v431 = vadd.f32 %v424, %v429
    %v432 = vmax.f32 %v431, 0.0
    %v433 = vpack.c.bf16 %v432, %v432
    %s434 = sshll.u32 %s342, 4
    %435 = dma.done %s169, %s434
    %v436 = vld [vmem:[#allocation3] sm:$0xff]
    %v437 = vld [vmem:[#allocation3 + $0x8] sm:$0xff]
    %v438 = vld [vmem:[#allocation3 + $0x10] sm:$0xff]
    %v439 = vld [vmem:[#allocation3 + $0x18] sm:$0xff]
    %v440 = vld [vmem:[#allocation3 + $0x20] sm:$0xff]
    %v441 = vld [vmem:[#allocation3 + $0x28] sm:$0xff]
    %v442 = vld [vmem:[#allocation3 + $0x30] sm:$0xff]
    %v443 = vld [vmem:[#allocation3 + $0x38] sm:$0xff]
    %v444 = vld [vmem:[#allocation17] sm:$0x1]
    %v445 = vld [vmem:[#allocation18] sm:$0x1]
    %446 = vmatprep.subr.bf16.mxu0 0
    %447 = vmatpush1.bf16.msra.mxu0 %v436
    %448 = vmatprep.subr.bf16.mxu0 0
    %449 = vmatpush1.bf16.msra.mxu0 %v437
    %450 = vmatprep.subr.bf16.mxu0 0
    %451 = vmatpush1.bf16.msra.mxu0 %v438
    %452 = vmatprep.subr.bf16.mxu0 0
    %453 = vmatpush1.bf16.msra.mxu0 %v439
    %454 = vmatprep.subr.bf16.mxu0 0
    %455 = vmatpush1.bf16.msra.mxu0 %v440
    %456 = vmatprep.subr.bf16.mxu0 0
    %457 = vmatpush1.bf16.msra.mxu0 %v441
    %458 = vmatprep.subr.bf16.mxu0 0
    %459 = vmatpush1.bf16.msra.mxu0 %v442
    %460 = vmatprep.subr.bf16.mxu0 0
    %461 = vmatpush1.bf16.msra.mxu0 %v443
    %462 = vmatprep.subr.bf16.mxu0 0
    %463 = vmatpush1.bf16.msra.mxu0 0
    %464 = vmatprep.subr.bf16.mxu0 0
    %465 = vmatpush1.bf16.msra.mxu0 0
    %466 = vmatprep.subr.bf16.mxu0 0
    %467 = vmatpush1.bf16.msra.mxu0 0
    %468 = vmatprep.subr.bf16.mxu0 0
    %469 = vmatpush1.bf16.msra.mxu0 0
    %470 = vmatprep.subr.bf16.mxu0 0
    %471 = vmatpush1.bf16.msra.mxu0 0
    %472 = vmatprep.subr.bf16.mxu0 0
    %473 = vmatpush1.bf16.msra.mxu0 0
    %474 = vmatprep.subr.bf16.mxu0 0
    %475 = vmatpush1.bf16.msra.mxu0 0
    %476 = vmatprep.subr.bf16.mxu0 0
    %477 = vmatpush1.bf16.msra.mxu0 0
    %478 = vmatprep.mubr.bf16.mxu0 0
    %479 = vmatmul.mubr.bf16.gmra.mrb[0].mxu0 %v433
    %v480 = vpop.f32.mrb[0].mxu0
    %v481 = vadd.f32 0.0, %v480
    %v482 = vpop.f32.mrb[0].mxu0
    %v483 = vpop.f32.mrb[0].mxu0
    %v484 = vpop.f32.mrb[0].mxu0
    %485 = vdwg.mxu0
    %v486 = vrot.slane %v481, 4
    %v487 = vadd.f32 %v481, %v486
    %v488 = vrot.slane %v487, 2
    %v489 = vadd.f32 %v487, %v488
    %v490 = vrot.slane %v489, 1
    %v491 = vadd.f32 %v489, %v490
    %v492 = vmul.f32 %v491, %v307
    %v493 = vmul.f32 %v481, %v481
    %v494 = vrot.slane %v493, 4
    %v495 = vadd.f32 %v493, %v494
    %v496 = vrot.slane %v495, 2
    %v497 = vadd.f32 %v495, %v496
    %v498 = vrot.slane %v497, 1
    %v499 = vadd.f32 %v497, %v498
    %v500 = vmul.f32 %v499, %v307
    %v501 = vmul.f32 %v492, %v492
    %v502 = vsub.f32 %v500, %v501
    %v503 = vmax.f32 %v502, 0.0
    %v504 = vadd.f32 %v503, 1e-05
    %v505 = vrsqrt.pop %v504
    %v506 = vmul.f32 %v444, %v505
    %v507 = vmul.f32 %v492, %v506
    %v508 = vsub.f32 %v445, %v507
    %v510 = vlaneseq
    %v511 = vshrl.u32 %v510, 7
    %v512 = vsub.s32 0, %v511
    %v513 = vrot.slane %v506, %v512
    %v515 = vmul.f32 %v481, %v513
    %v517 = vlaneseq
    %v518 = vshrl.u32 %v517, 7
    %v519 = vsub.s32 0, %v518
    %v520 = vrot.slane %v508, %v519
    %v522 = vadd.f32 %v515, %v520
    %v523 = vmax.f32 %v522, 0.0
    %v524 = vpack.c.bf16 %v523, %v523
    %s525 = sshll.u32 %s342, 4
    %526 = dma.done %s181, %s525
    %v527 = vld [vmem:[#allocation4] sm:$0xff]
    %v528 = vld [vmem:[#allocation4 + $0x8] sm:$0xff]
    %v529 = vld [vmem:[#allocation4 + $0x10] sm:$0xff]
    %v530 = vld [vmem:[#allocation4 + $0x18] sm:$0xff]
    %v531 = vld [vmem:[#allocation4 + $0x20] sm:$0xff]
    %v532 = vld [vmem:[#allocation4 + $0x28] sm:$0xff]
    %v533 = vld [vmem:[#allocation4 + $0x30] sm:$0xff]
    %v534 = vld [vmem:[#allocation4 + $0x38] sm:$0xff]
    %v535 = vld [vmem:[#allocation20] sm:$0x1]
    %v536 = vld [vmem:[#allocation21] sm:$0x1]
    %537 = vmatprep.subr.bf16.mxu0 0
    %538 = vmatpush1.bf16.msra.mxu0 %v527
    %539 = vmatprep.subr.bf16.mxu0 0
    %540 = vmatpush1.bf16.msra.mxu0 %v528
    %541 = vmatprep.subr.bf16.mxu0 0
    %542 = vmatpush1.bf16.msra.mxu0 %v529
    %543 = vmatprep.subr.bf16.mxu0 0
    %544 = vmatpush1.bf16.msra.mxu0 %v530
    %545 = vmatprep.subr.bf16.mxu0 0
    %546 = vmatpush1.bf16.msra.mxu0 %v531
    %547 = vmatprep.subr.bf16.mxu0 0
    %548 = vmatpush1.bf16.msra.mxu0 %v532
    %549 = vmatprep.subr.bf16.mxu0 0
    %550 = vmatpush1.bf16.msra.mxu0 %v533
    %551 = vmatprep.subr.bf16.mxu0 0
    %552 = vmatpush1.bf16.msra.mxu0 %v534
    %553 = vmatprep.subr.bf16.mxu0 0
    %554 = vmatpush1.bf16.msra.mxu0 0
    %555 = vmatprep.subr.bf16.mxu0 0
    %556 = vmatpush1.bf16.msra.mxu0 0
    %557 = vmatprep.subr.bf16.mxu0 0
    %558 = vmatpush1.bf16.msra.mxu0 0
    %559 = vmatprep.subr.bf16.mxu0 0
    %560 = vmatpush1.bf16.msra.mxu0 0
    %561 = vmatprep.subr.bf16.mxu0 0
    %562 = vmatpush1.bf16.msra.mxu0 0
    %563 = vmatprep.subr.bf16.mxu0 0
    %564 = vmatpush1.bf16.msra.mxu0 0
    %565 = vmatprep.subr.bf16.mxu0 0
    %566 = vmatpush1.bf16.msra.mxu0 0
    %567 = vmatprep.subr.bf16.mxu0 0
    %568 = vmatpush1.bf16.msra.mxu0 0
    %569 = vmatprep.mubr.bf16.mxu0 0
    %570 = vmatmul.mubr.bf16.gmra.mrb[0].mxu0 %v524
    %v571 = vpop.f32.mrb[0].mxu0
    %v572 = vadd.f32 0.0, %v571
    %v573 = vpop.f32.mrb[0].mxu0
    %v574 = vpop.f32.mrb[0].mxu0
    %v575 = vpop.f32.mrb[0].mxu0
    %576 = vdwg.mxu0
    %v577 = vrot.slane %v572, 4
    %v578 = vadd.f32 %v572, %v577
    %v579 = vrot.slane %v578, 2
    %v580 = vadd.f32 %v578, %v579
    %v581 = vrot.slane %v580, 1
    %v582 = vadd.f32 %v580, %v581
    %v583 = vmul.f32 %v582, %v307
    %v584 = vmul.f32 %v572, %v572
    %v585 = vrot.slane %v584, 4
    %v586 = vadd.f32 %v584, %v585
    %v587 = vrot.slane %v586, 2
    %v588 = vadd.f32 %v586, %v587
    %v589 = vrot.slane %v588, 1
    %v590 = vadd.f32 %v588, %v589
    %v591 = vmul.f32 %v590, %v307
    %v592 = vmul.f32 %v583, %v583
    %v593 = vsub.f32 %v591, %v592
    %v594 = vmax.f32 %v593, 0.0
    %v595 = vadd.f32 %v594, 1e-05
    %v596 = vrsqrt.pop %v595
    %v597 = vmul.f32 %v535, %v596
    %v598 = vmul.f32 %v583, %v597
    %v599 = vsub.f32 %v536, %v598
    %v601 = vlaneseq
    %v602 = vshrl.u32 %v601, 7
    %v603 = vsub.s32 0, %v602
    %v604 = vrot.slane %v597, %v603
    %v606 = vmul.f32 %v572, %v604
    %v608 = vlaneseq
    %v609 = vshrl.u32 %v608, 7
    %v610 = vsub.s32 0, %v609
    %v611 = vrot.slane %v599, %v610
    %v613 = vadd.f32 %v606, %v611
    %v614 = vld [vmem:[#allocation6] sm:$0xff]
    %v615 = vadd.f32 %v613, %v614
    %v616 = vmax.f32 %v615, 0.0
    %617 = vst [vmem:[#allocation23] sm:$0xff] %v616
    // Predicated region
    $region94: #{tpu_custom_call.1} parent=1 // pred_check
      _
    $region95: #{tpu_custom_call.1} parent=1 // pred_check_branch
      %619 = sbr.rel (0) target = $region97
    $region96: #{tpu_custom_call.1} parent=1 // pred_region
      %s621 = ssub.s32 128, 128
      %622 = vsyncadd [#allocation8], %s621
      %s624 = sshll.u32 [#allocation23], 4
      %s625 = int_to_ptr.vmem [resolvable:$true] %s624
      %627 = dma.vmem_to_hbm [thread:$0]  %s625, 128, %s13, [#allocation8]
    $region97: #{tpu_custom_call.1} parent=1 // pred_fallthru
      _
    // Predicated region
    $region98: #{tpu_custom_call.1} parent=1 // pred_check
      _
    $region99: #{tpu_custom_call.1} parent=1 // pred_check_branch
      %629 = sbr.rel (0) target = $region101
    $region100: #{tpu_custom_call.1} parent=1 // pred_region
      %630 = dma.done [#allocation8], 128
    $region101: #{tpu_custom_call.1} parent=1 // pred_fallthru
      _
    %631 = vsyncpa [#allocation7], 1
    %632 = vsyncpa [#allocation10], 1
    %633 = vsyncpa [#allocation13], 1
    %634 = vsyncpa [#allocation16], 1
    %635 = vsyncpa [#allocation19], 1
    %636 = vsyncpa [#allocation22], 1
    %637 = vsyncpa [#allocation8], 1
  %638 = vsyncmov [#allocation5]
  %s639 = vpop.sfrf %638
  %p640 = scmp.eq.s32.totalorder %s639, 0
  %p641 = pneg %p640
  %643 = shalt.err (%p641)
  %s644 = scalar_lea.sflag [#allocation5], 1
  %645 = vsyncmov %s644
  %s646 = vpop.sfrf %645
  %p647 = scmp.eq.s32.totalorder %s646, 0
  %p648 = pneg %p647
  %650 = shalt.err (%p648)
  %s651 = scalar_lea.sflag [#allocation5], 2
  %652 = vsyncmov %s651
  %s653 = vpop.sfrf %652
  %p654 = scmp.eq.s32.totalorder %s653, 0
  %p655 = pneg %p654
  %657 = shalt.err (%p655)

</llo_original>
